<compile_context>
chip_gen: v6e
topology: v6e:2x2x1
jax: 0.10.0
libtpu: 0.0.40
codegen_flags: <defaults>
</compile_context>

<pallas_src>
import jax
import jax.numpy as jnp
from jax.experimental import pallas as pl
from jax.experimental.pallas import tpu as pltpu


def _round_up(x, m):
    return ((x + m - 1) // m) * m


def _w2v_kernel(emb_ref, w_ref, b_ref, o_ref):
    # emb_ref: (TM, E)   gathered embedding rows for this row tile (bf16/f32)
    # w_ref:   (E, TN)   linear_out weight slice, in x out layout (bf16/f32)
    # b_ref:   (1, TN)   linear_out bias slice (f32)
    # o_ref:   (TM, TN)  output tile (f32)
    e = jnp.maximum(emb_ref[...], 0)                                 # ReLU(embedding(x))
    y = jnp.dot(e, w_ref[...], preferred_element_type=jnp.float32)   # MXU, f32 accumulate
    y = y + b_ref[...]                                               # bias broadcast over rows
    o_ref[...] = jnp.maximum(y, 0.0).astype(o_ref.dtype)             # ReLU(linear_out(...))


def word2vec_forward(x_ids, emb_table, w_out, b_out, *, tm=512, tn=1024):
    """x_ids: (B, S) int32 token ids.
    emb_table: (V, E)  float32 or bfloat16
    w_out:     (E, O)  float32 or bfloat16   (O = n_output * V)
    b_out:     (O,)    float32
    returns:   (B, S, O) float32
    """
    B, S = x_ids.shape
    V, E = emb_table.shape
    O = w_out.shape[1]
    M = B * S

    # Clamp tile sizes to the (padded) problem and keep (8,128) alignment.
    tm = max(8, min(tm, _round_up(M, 8)))
    tn = max(128, min(tn, _round_up(O, 128)))
    m_pad = _round_up(M, tm)
    o_pad = _round_up(O, tn)

    # Glue: embedding gather (data-dependent row lookup) in plain JAX.
    # TODO(synk): fuse the gather into the kernel (scalar-prefetch token ids +
    # VMEM-resident table) to eliminate the (M, E) HBM round trip.
    emb = jnp.take(emb_table, x_ids.reshape(-1), axis=0)             # (M, E)
    if m_pad != M:
        emb = jnp.pad(emb, ((0, m_pad - M), (0, 0)))

    w = w_out
    b = b_out.reshape(1, O).astype(jnp.float32)
    if o_pad != O:
        w = jnp.pad(w, ((0, 0), (0, o_pad - O)))
        b = jnp.pad(b, ((0, 0), (0, o_pad - O)))

    # Grid: O tiles on the slow (outer) axis, M tiles on the fast (inner) axis,
    # so the large (E, TN) weight tile stays resident across the inner M loop
    # and is fetched only once per output-column tile.
    grid = (o_pad // tn, m_pad // tm)

    out = pl.pallas_call(
        _w2v_kernel,
        out_shape=jax.ShapeDtypeStruct((m_pad, o_pad), jnp.float32),
        grid_spec=pltpu.PrefetchScalarGridSpec(
            num_scalar_prefetch=0,
            grid=grid,
            in_specs=[
                pl.BlockSpec((tm, E), lambda j, i: (i, 0)),   # embeddings: cheap re-fetch per row tile
                pl.BlockSpec((E, tn), lambda j, i: (0, j)),   # weights: constant over inner M loop
                pl.BlockSpec((1, tn), lambda j, i: (0, j)),   # bias
            ],
            out_specs=pl.BlockSpec((tm, tn), lambda j, i: (i, j)),
        ),
        compiler_params=pltpu.CompilerParams(
            # No reduction axis in the grid (K = E lives inside the block), so
            # both axes are independent -> shardable across v7x's 2 TensorCores.
            dimension_semantics=("parallel", "parallel"),
            vmem_limit_bytes=64 * 1024 * 1024,
        ),
    )(emb, w, b)

    return out[:M, :O].reshape(B, S, O)


if __name__ == "__main__":
    # Small shapes consistent with the module.
    vocab_size = 64
    embed_dim = 32
    n_output = 2
    output_dim = n_output * vocab_size   # 128
    batch, seq = 2, 8

    key = jax.random.PRNGKey(0)
    k_emb, k_w, k_b, k_x = jax.random.split(key, 4)

    # Deterministic parameter init (nn.Embedding ~ N(0,1); nn.Linear ~ uniform).
    emb_table = jax.random.normal(k_emb, (vocab_size, embed_dim), dtype=jnp.float32)
    bound = 1.0 / (embed_dim ** 0.5)
    w_out = jax.random.uniform(k_w, (embed_dim, output_dim),
                               minval=-bound, maxval=bound, dtype=jnp.float32)
    b_out = jax.random.uniform(k_b, (output_dim,),
                               minval=-bound, maxval=bound, dtype=jnp.float32)

    x_ids = jax.random.randint(k_x, (batch, seq), 0, vocab_size, dtype=jnp.int32)

    # bf16 embedding table / weights halve the dominant HBM streams; the kernel
    # keeps f32 accumulation and f32 output.
    emb_bf16 = emb_table.astype(jnp.bfloat16)
    w_bf16 = w_out.astype(jnp.bfloat16)

    out = jax.jit(word2vec_forward)(x_ids, emb_bf16, w_bf16, b_out)
    out = jax.block_until_ready(out)

    # Pure-JAX reference with the same (bf16) parameters, f32 math.
    ref = jnp.maximum(jnp.take(emb_bf16, x_ids, axis=0).astype(jnp.float32), 0.0)
    ref = jnp.maximum(ref @ w_bf16.astype(jnp.float32) + b_out, 0.0)

    assert out.shape == (batch, seq, output_dim)
    assert jnp.allclose(out, ref, atol=1e-2, rtol=1e-2), float(jnp.max(jnp.abs(out - ref)))

    print("KERNEL_OK")
</pallas_src>

<mosaic_0001>
module attributes {stable_mosaic.version = 11 : i64} {
  func.func @_w2v_kernel(%arg0: i32, %arg1: i32, %arg2: memref<16x32xbf16, #tpu.memory_space<vmem>>, %arg3: memref<32x128xbf16, #tpu.memory_space<vmem>>, %arg4: memref<1x128xf32, #tpu.memory_space<vmem>>, %arg5: memref<16x128xf32, #tpu.memory_space<vmem>>) attributes {dimension_semantics = [#tpu.dimension_semantics<parallel>, #tpu.dimension_semantics<parallel>], iteration_bounds = array<i64: 1, 1>, scalar_prefetch = 0 : i64, scratch_operands = 0 : i64, tpu.core_type = #tpu.core_type<tc>, window_params = [{transform_indices = @transform_0, window_bounds = array<i64: 16, 32>}, {transform_indices = @transform_1, window_bounds = array<i64: 32, 128>}, {transform_indices = @transform_2, window_bounds = array<i64: 1, 128>}, {transform_indices = @transform_3, window_bounds = array<i64: 16, 128>}]} {
    %c0 = arith.constant 0 : index
    %c0_0 = arith.constant 0 : index
    %0 = vector.load %arg2[%c0, %c0_0] : memref<16x32xbf16, #tpu.memory_space<vmem>>, vector<16x32xbf16>
    %cst = arith.constant 0.000000e+00 : bf16
    %1 = vector.broadcast %cst : bf16 to vector<16x32xbf16>
    %2 = arith.maximumf %0, %1 : vector<16x32xbf16>
    %c0_1 = arith.constant 0 : index
    %c0_2 = arith.constant 0 : index
    %3 = vector.load %arg3[%c0_1, %c0_2] : memref<32x128xbf16, #tpu.memory_space<vmem>>, vector<32x128xbf16>
    %cst_3 = arith.constant dense<0.000000e+00> : vector<16x128xf32>
    %4 = tpu.matmul %2, %3, %cst_3 {dimension_numbers = #tpu.dot_dimension_numbers<[1], [0], [0], [1], [0, 0, 1, 1], [], []>} : vector<16x32xbf16>, vector<32x128xbf16>, vector<16x128xf32> -> vector<16x128xf32>
    %c0_4 = arith.constant 0 : index
    %c0_5 = arith.constant 0 : index
    %5 = vector.load %arg4[%c0_4, %c0_5] : memref<1x128xf32, #tpu.memory_space<vmem>>, vector<1x128xf32>
    %6 = vector.broadcast %5 : vector<1x128xf32> to vector<16x128xf32>
    %7 = arith.addf %4, %6 : vector<16x128xf32>
    %cst_6 = arith.constant 0.000000e+00 : f32
    %8 = vector.broadcast %cst_6 : f32 to vector<16x128xf32>
    %9 = arith.maximumf %7, %8 : vector<16x128xf32>
    %c0_7 = arith.constant 0 : index
    %c0_8 = arith.constant 0 : index
    %10 = vector.load %arg5[%c0_7, %c0_8] : memref<16x128xf32, #tpu.memory_space<vmem>>, vector<16x128xf32>
    tpu.vector_store %arg5[%c0_7, %c0_8], %9 {strides = array<i32>} : memref<16x128xf32, #tpu.memory_space<vmem>>, vector<16x128xf32>,
    return
  }
  func.func @transform_0(%arg0: i32, %arg1: i32) -> (i32, i32) {
    %c0_i32 = arith.constant 0 : i32
    %c0_i32_0 = arith.constant 0 : i32
    return %arg1, %c0_i32 : i32, i32
  }
  func.func @transform_1(%arg0: i32, %arg1: i32) -> (i32, i32) {
    %c0_i32 = arith.constant 0 : i32
    %c0_i32_0 = arith.constant 0 : i32
    return %c0_i32, %arg0 : i32, i32
  }
  func.func @transform_2(%arg0: i32, %arg1: i32) -> (i32, i32) {
    %c0_i32 = arith.constant 0 : i32
    %c0_i32_0 = arith.constant 0 : i32
    return %c0_i32, %arg0 : i32, i32
  }
  func.func @transform_3(%arg0: i32, %arg1: i32) -> (i32, i32) {
    %c0_i32 = arith.constant 0 : i32
    return %arg1, %arg0 : i32, i32
  }
}

</mosaic_0001>

<llo_original>
// kernel: word2vec_forward.1
$region0: #{word2vec_forward.1}
  #allocation0 [shape = 'u32[]', space=smem, size = 0x4, offset = 0x4, fixed_abs, tag = 'smem constant byte address 0x4 - core index']
  #allocation1 [shape = 'u32[144,128]{1,0:T(1,128)}', space=vmem, size = 0x12000, scoped, tag = 'internal scratch']
  %s0 = inlined_call_operand.vmem [shape: bf16[16,32], index: 0, kind: input, shape index: {}]
  %s1 = inlined_call_operand.vmem [shape: bf16[32,128], index: 1, kind: input, shape index: {}]
  %s2 = inlined_call_operand.vmem [shape: f32[1,128], index: 2, kind: input, shape index: {}]
  %s3 = inlined_call_operand.hbm [shape: f32[16,128], index: 3, kind: output, shape index: {}]
  %s4 = sld [smem:[#allocation0]]
  $region22: #{word2vec_forward.1} parent=0
    _
  %s6 = ssub.s32 1, %s4
  %s7 = scalar_select 0, %s6, %s4
  $region1: #{word2vec_forward.1} parent=0
    #allocation2 [shape = 'u8[8192]{0}', space=vmem, size = 0x2000, scoped, tag = 'output window, operand 0, single buffered']
    #allocation3 [shape = 's32[1]{0}', space=sflag, size = 0x4, scoped, tag = 'scoped memory for word2vec_forward.1']
    %8 = vsyncpa [#allocation3], 0
    // Predicated region
    $region2: #{word2vec_forward.1} parent=1 // pred_check
      _
    $region3: #{word2vec_forward.1} parent=1 // pred_check_branch
      %10 = sbr.rel (0) target = $region5
    $region4: #{word2vec_forward.1} parent=1 // pred_region
      _
    $region5: #{word2vec_forward.1} parent=1 // pred_fallthru
      _
    // Predicated region
    $region6: #{word2vec_forward.1} parent=1 // pred_check
      _
    $region7: #{word2vec_forward.1} parent=1 // pred_check_branch
      %12 = sbr.rel (0) target = $region9
    $region8: #{word2vec_forward.1} parent=1 // pred_region
      _
    $region9: #{word2vec_forward.1} parent=1 // pred_fallthru
      _
    // Predicated region
    $region10: #{word2vec_forward.1} parent=1 // pred_check
      _
    $region11: #{word2vec_forward.1} parent=1 // pred_check_branch
      %14 = sbr.rel (0) target = $region13
    $region12: #{word2vec_forward.1} parent=1 // pred_region
      _
    $region13: #{word2vec_forward.1} parent=1 // pred_fallthru
      _
    %v16 = vld [vmem:[%s0] sm:$0xf]
    %v17 = vld [vmem:[%s0 + $0x4] sm:$0xf]
    %v18 = vmax.bf16 %v16, 0
    %v19 = vmax.bf16 %v17, 0
    %v20 = vld [vmem:[%s1] sm:$0xf]
    %v21 = vld [vmem:[%s1 + $0x4] sm:$0xf]
    %v22 = vld [vmem:[%s1 + $0x8] sm:$0xf]
    %v23 = vld [vmem:[%s1 + $0xc] sm:$0xf]
    %v24 = vld [vmem:[%s2] sm:$0x1]
    %v26 = vlaneseq
    %v27 = vshrl.u32 %v26, 7
    %v28 = vsub.s32 0, %v27
    %v29 = vrot.slane %v24, %v28
    %v33 = vunpack.c.l.b16 %v18
    %v34 = vunpack.c.l.b16 %v19
    %v35 = vpack.c.b16 %v34, %v33
    %v40 = vunpack.c.l.b16 %v20
    %v41 = vunpack.c.l.b16 %v21
    %v42 = vunpack.c.l.b16 %v22
    %v43 = vunpack.c.l.b16 %v23
    %v44 = vpack.c.b16 %v41, %v40
    %v45 = vpack.c.b16 %v43, %v42
    %vm48 = vcmask 261120
    %v50 = vsel %vm48, %v35, 0
    %52 = vmatprep.subr.bf16.mxu0 0
    %53 = vmatpush1.bf16.msra.mxu0 0
    %54 = vmatprep.subr.bf16.mxu0 0
    %55 = vmatpush1.bf16.msra.mxu0 0
    %56 = vmatprep.subr.bf16.mxu0 0
    %57 = vmatpush1.bf16.msra.mxu0 0
    %58 = vmatprep.subr.bf16.mxu0 0
    %59 = vmatpush1.bf16.msra.mxu0 0
    %60 = vmatprep.subr.bf16.mxu0 0
    %61 = vmatpush1.bf16.msra.mxu0 0
    %62 = vmatprep.subr.bf16.mxu0 0
    %63 = vmatpush1.bf16.msra.mxu0 0
    %64 = vmatprep.subr.bf16.mxu0 0
    %65 = vmatpush1.bf16.msra.mxu0 %v45
    %66 = vmatprep.subr.bf16.mxu0 0
    %67 = vmatpush1.bf16.msra.mxu0 %v44
    %68 = vmatprep.subr.bf16.mxu0 0
    %69 = vmatpush2.bf16.msra.mxu0 0
    %70 = vmatprep.subr.bf16.mxu0 0
    %71 = vmatpush2.bf16.msra.mxu0 0
    %72 = vmatprep.subr.bf16.mxu0 0
    %73 = vmatpush2.bf16.msra.mxu0 0
    %74 = vmatprep.subr.bf16.mxu0 0
    %75 = vmatpush2.bf16.msra.mxu0 0
    %76 = vmatprep.subr.bf16.mxu0 0
    %77 = vmatpush2.bf16.msra.mxu0 0
    %78 = vmatprep.subr.bf16.mxu0 0
    %79 = vmatpush2.bf16.msra.mxu0 0
    %80 = vmatprep.subr.bf16.mxu0 0
    %81 = vmatpush2.bf16.msra.mxu0 0
    %82 = vmatprep.subr.bf16.mxu0 0
    %83 = vmatpush2.bf16.msra.mxu0 0
    %84 = vmatprep.mubr.bf16.mxu0 0
    %85 = vmatmul.mubr.bf16.gmra.mxu0 %v50
    %v86 = vpop.f32.mrf.mxu0
    %v87 = vadd.f32 %v29, %v86
    %v88 = vpop.f32.mrf.mxu0
    %v89 = vpop.f32.mrf.mxu0
    %v90 = vadd.f32 %v29, %v89
    %v91 = vpop.f32.mrf.mxu0
    %92 = vdwg.mxu0
    %v93 = vmax.f32 %v87, 0.0
    %v94 = vmax.f32 %v90, 0.0
    %95 = vst [vmem:[#allocation2] sm:$0xff] %v93
    %96 = vst [vmem:[#allocation2 + $0x8] sm:$0xff] %v94
    // Predicated region
    $region14: #{word2vec_forward.1} parent=1 // pred_check
      _
    $region15: #{word2vec_forward.1} parent=1 // pred_check_branch
      %98 = sbr.rel (0) target = $region17
    $region16: #{word2vec_forward.1} parent=1 // pred_region
      %s100 = ssub.s32 256, 256
      %101 = vsyncadd [#allocation3], %s100
      %s102 = sshll.u32 [#allocation2], 4
      %s103 = int_to_ptr.vmem [resolvable:$true] %s102
      %108 = dma.vmem_to_hbm [thread:$0]  %s103, 256, %s3, [#allocation3], 128, 128, 8
    $region17: #{word2vec_forward.1} parent=1 // pred_fallthru
      _
    // Predicated region
    $region18: #{word2vec_forward.1} parent=1 // pred_check
      _
    $region19: #{word2vec_forward.1} parent=1 // pred_check_branch
      %110 = sbr.rel (0) target = $region21
    $region20: #{word2vec_forward.1} parent=1 // pred_region
      %111 = dma.done [#allocation3], 256
    $region21: #{word2vec_forward.1} parent=1 // pred_fallthru
      _
    %112 = vsyncpa [#allocation3], 1

</llo_original>
